<compile_context>
chip_gen: v6e
topology: v6e:2x2x1
jax: 0.10.0
libtpu: 0.0.40
codegen_flags: <defaults>
</compile_context>

<pallas_src>
import jax
import jax.numpy as jnp
from jax.experimental import pallas as pl
from jax.experimental.pallas import tpu as pltpu

LANE = 128
SUBLANE = 8


def _round_up(x, m):
    return ((x + m - 1) // m) * m


def dense_nn_kernel(x_ref, w1_ref, b1_ref, w2_ref, b2_ref, o_ref):
    """One batch tile: o = relu(x @ W1 + b1) @ W2 + b2 (all dims lane-padded)."""
    h = jnp.dot(x_ref[...], w1_ref[...], preferred_element_type=jnp.float32)
    h = jnp.maximum(h + b1_ref[...], 0.0)          # bias-add / ReLU kept in f32 (v5e VPU)
    out = jnp.dot(h.astype(w2_ref.dtype), w2_ref[...],
                  preferred_element_type=jnp.float32)
    o_ref[...] = (out + b2_ref[...]).astype(o_ref.dtype)


def dense_nn_forward(x, w1_t, b1, w2_t, b2, *, block_b=512, use_bf16=False):
    """x: (B, 784); w1_t: (784, H); b1: (1, H); w2_t: (H, 10); b2: (1, 10).

    Returns (B, 10) float32, identical math to DenseNN.forward.
    """
    B, K = x.shape
    H = w1_t.shape[1]
    out_dim = w2_t.shape[1]

    Kp = _round_up(K, LANE)        # 784 -> 896: unmasked vld, full MXU K passes
    Hp = _round_up(H, LANE)        # hidden lane-aligned (zero pad cols + zero bias)
    Np = _round_up(out_dim, LANE)  # 10 -> 128: lane-dense output stores

    # Batch tile: sublane multiple (16 for bf16 packing), capped by block_b.
    sub = 16 if use_bf16 else SUBLANE
    tb = min(block_b, _round_up(B, sub))
    Bp = _round_up(B, tb)

    in_dtype = jnp.bfloat16 if use_bf16 else jnp.float32

    # Zero-padded, lane-aligned operands (one-time wrapper cost; weights would be
    # pre-padded once in a real deployment).
    xp = jnp.zeros((Bp, Kp), in_dtype).at[:B, :K].set(x.astype(in_dtype))
    w1p = jnp.zeros((Kp, Hp), in_dtype).at[:K, :H].set(w1_t.astype(in_dtype))
    b1p = jnp.zeros((1, Hp), jnp.float32).at[:, :H].set(b1.astype(jnp.float32))
    w2p = jnp.zeros((Hp, Np), in_dtype).at[:H, :out_dim].set(w2_t.astype(in_dtype))
    b2p = jnp.zeros((1, Np), jnp.float32).at[:, :out_dim].set(b2.astype(jnp.float32))

    grid = (Bp // tb,)
    isz = jnp.dtype(in_dtype).itemsize

    # VMEM budget: double-buffered x/out tiles + resident weights/biases + hidden.
    vmem_bytes = (2 * tb * Kp * isz + 2 * tb * Np * 4
                  + 2 * (Kp * Hp + Hp * Np) * isz + 2 * (Hp + Np) * 4
                  + tb * Hp * 4)
    vmem_limit = int(min(max(2 * vmem_bytes, 32 * 1024 * 1024),
                         60 * 1024 * 1024))  # stay under v7x's 64 MiB/TC

    cost = pl.CostEstimate(
        flops=2 * Bp * (Kp * Hp + Hp * Np),
        transcendentals=0,
        bytes_accessed=(Bp * Kp * isz + (Kp * Hp + Hp * Np) * isz
                        + (Hp + Np) * 4 + Bp * Np * 4),
    )

    out_padded = pl.pallas_call(
        dense_nn_kernel,
        out_shape=jax.ShapeDtypeStruct((Bp, Np), jnp.float32),
        grid_spec=pl.GridSpec(
            grid=grid,
            in_specs=[
                pl.BlockSpec((tb, Kp), lambda i: (i, 0)),   # streamed x tiles
                pl.BlockSpec((Kp, Hp), lambda i: (0, 0)),   # resident W1
                pl.BlockSpec((1, Hp), lambda i: (0, 0)),    # resident b1
                pl.BlockSpec((Hp, Np), lambda i: (0, 0)),   # resident W2
                pl.BlockSpec((1, Np), lambda i: (0, 0)),    # resident b2
            ],
            out_specs=pl.BlockSpec((tb, Np), lambda i: (i, 0)),
        ),
        compiler_params=pltpu.CompilerParams(
            dimension_semantics=("parallel",),   # shard batch tiles across TCs (v7x)
            vmem_limit_bytes=vmem_limit,
        ),
        cost_estimate=cost,
    )(xp, w1p, b1p, w2p, b2p)

    return out_padded[:B, :out_dim]


def init_params(key, num_hidden_units):
    """Deterministic init mirroring nn.Linear shapes (784,H) and (H,10)."""
    k1, k2, k3, k4 = jax.random.split(key, 4)
    # PyTorch Linear weights are (out, in); we keep the transposed (in, out)
    # form so the kernel computes x @ W directly.
    bound1 = 1.0 / jnp.sqrt(784.0)
    w1_t = jax.random.uniform(k1, (784, num_hidden_units),
                              minval=-bound1, maxval=bound1, dtype=jnp.float32)
    b1 = jax.random.uniform(k2, (1, num_hidden_units),
                            minval=-bound1, maxval=bound1, dtype=jnp.float32)
    bound2 = 1.0 / jnp.sqrt(float(num_hidden_units))
    w2_t = jax.random.uniform(k3, (num_hidden_units, 10),
                              minval=-bound2, maxval=bound2, dtype=jnp.float32)
    b2 = jax.random.uniform(k4, (1, 10),
                            minval=-bound2, maxval=bound2, dtype=jnp.float32)
    return w1_t, b1, w2_t, b2


if __name__ == "__main__":
    key = jax.random.PRNGKey(0)
    kx, kp, kx2 = jax.random.split(key, 3)

    num_hidden_units = 32
    w1_t, b1, w2_t, b2 = init_params(kp, num_hidden_units)

    # Small single-tile case (B=8 -> one grid step).
    batch = 8
    x = jax.random.normal(kx, (batch, 784), dtype=jnp.float32)
    out = jax.block_until_ready(dense_nn_forward(x, w1_t, b1, w2_t, b2))
    ref = jnp.maximum(x @ w1_t + b1, 0.0) @ w2_t + b2
    assert out.shape == (batch, 10)
    assert jnp.allclose(out, ref, atol=1e-4, rtol=1e-4)

    # Non-multiple batch exercising the tiled (multi-step) pipeline + batch padding.
    batch2 = 200
    x2 = jax.random.normal(kx2, (batch2, 784), dtype=jnp.float32)
    out2 = jax.block_until_ready(
        dense_nn_forward(x2, w1_t, b1, w2_t, b2, block_b=64))
    ref2 = jnp.maximum(x2 @ w1_t + b1, 0.0) @ w2_t + b2
    assert out2.shape == (batch2, 10)
    assert jnp.allclose(out2, ref2, atol=1e-4, rtol=1e-4)

    print("KERNEL_OK")
</pallas_src>

<mosaic_0001>
module attributes {stable_mosaic.version = 11 : i64} {
  func.func @dense_nn_kernel(%arg0: i32, %arg1: memref<8x896xf32, #tpu.memory_space<vmem>>, %arg2: memref<896x128xf32, #tpu.memory_space<vmem>>, %arg3: memref<1x128xf32, #tpu.memory_space<vmem>>, %arg4: memref<128x128xf32, #tpu.memory_space<vmem>>, %arg5: memref<1x128xf32, #tpu.memory_space<vmem>>, %arg6: memref<8x128xf32, #tpu.memory_space<vmem>>) attributes {dimension_semantics = [#tpu.dimension_semantics<parallel>], iteration_bounds = array<i64: 1>, scalar_prefetch = 0 : i64, scratch_operands = 0 : i64, tpu.core_type = #tpu.core_type<tc>, window_params = [{transform_indices = @transform_0, window_bounds = array<i64: 8, 896>}, {pipeline_mode = #tpu.pipeline_mode<synchronous>, transform_indices = @transform_1, window_bounds = array<i64: 896, 128>}, {pipeline_mode = #tpu.pipeline_mode<synchronous>, transform_indices = @transform_2, window_bounds = array<i64: 1, 128>}, {pipeline_mode = #tpu.pipeline_mode<synchronous>, transform_indices = @transform_3, window_bounds = array<i64: 128, 128>}, {pipeline_mode = #tpu.pipeline_mode<synchronous>, transform_indices = @transform_4, window_bounds = array<i64: 1, 128>}, {transform_indices = @transform_5, window_bounds = array<i64: 8, 128>}]} {
    %c0 = arith.constant 0 : index
    %c0_0 = arith.constant 0 : index
    %0 = vector.load %arg1[%c0, %c0_0] : memref<8x896xf32, #tpu.memory_space<vmem>>, vector<8x896xf32>
    %c0_1 = arith.constant 0 : index
    %c0_2 = arith.constant 0 : index
    %1 = vector.load %arg2[%c0_1, %c0_2] : memref<896x128xf32, #tpu.memory_space<vmem>>, vector<896x128xf32>
    %cst = arith.constant dense<0.000000e+00> : vector<8x128xf32>
    %2 = tpu.matmul %0, %1, %cst {dimension_numbers = #tpu.dot_dimension_numbers<[1], [0], [0], [1], [0, 0, 1, 1], [], []>} : vector<8x896xf32>, vector<896x128xf32>, vector<8x128xf32> -> vector<8x128xf32>
    %c0_3 = arith.constant 0 : index
    %c0_4 = arith.constant 0 : index
    %3 = vector.load %arg3[%c0_3, %c0_4] : memref<1x128xf32, #tpu.memory_space<vmem>>, vector<1x128xf32>
    %4 = vector.broadcast %3 : vector<1x128xf32> to vector<8x128xf32>
    %5 = arith.addf %2, %4 : vector<8x128xf32>
    %cst_5 = arith.constant 0.000000e+00 : f32
    %6 = vector.broadcast %cst_5 : f32 to vector<8x128xf32>
    %7 = arith.maximumf %5, %6 : vector<8x128xf32>
    %c0_6 = arith.constant 0 : index
    %c0_7 = arith.constant 0 : index
    %8 = vector.load %arg4[%c0_6, %c0_7] : memref<128x128xf32, #tpu.memory_space<vmem>>, vector<128x128xf32>
    %cst_8 = arith.constant dense<0.000000e+00> : vector<8x128xf32>
    %9 = tpu.matmul %7, %8, %cst_8 {dimension_numbers = #tpu.dot_dimension_numbers<[1], [0], [0], [1], [0, 0, 1, 1], [], []>} : vector<8x128xf32>, vector<128x128xf32>, vector<8x128xf32> -> vector<8x128xf32>
    %c0_9 = arith.constant 0 : index
    %c0_10 = arith.constant 0 : index
    %10 = vector.load %arg5[%c0_9, %c0_10] : memref<1x128xf32, #tpu.memory_space<vmem>>, vector<1x128xf32>
    %11 = vector.broadcast %10 : vector<1x128xf32> to vector<8x128xf32>
    %12 = arith.addf %9, %11 : vector<8x128xf32>
    %c0_11 = arith.constant 0 : index
    %c0_12 = arith.constant 0 : index
    %13 = vector.load %arg6[%c0_11, %c0_12] : memref<8x128xf32, #tpu.memory_space<vmem>>, vector<8x128xf32>
    tpu.vector_store %arg6[%c0_11, %c0_12], %12 {strides = array<i32>} : memref<8x128xf32, #tpu.memory_space<vmem>>, vector<8x128xf32>,
    return
  }
  func.func @transform_0(%arg0: i32) -> (i32, i32) {
    %c0_i32 = arith.constant 0 : i32
    %c0_i32_0 = arith.constant 0 : i32
    return %arg0, %c0_i32 : i32, i32
  }
  func.func @transform_1(%arg0: i32) -> (i32, i32) {
    %c0_i32 = arith.constant 0 : i32
    %c0_i32_0 = arith.constant 0 : i32
    %c0_i32_1 = arith.constant 0 : i32
    return %c0_i32, %c0_i32_0 : i32, i32
  }
  func.func @transform_2(%arg0: i32) -> (i32, i32) {
    %c0_i32 = arith.constant 0 : i32
    %c0_i32_0 = arith.constant 0 : i32
    %c0_i32_1 = arith.constant 0 : i32
    return %c0_i32, %c0_i32_0 : i32, i32
  }
  func.func @transform_3(%arg0: i32) -> (i32, i32) {
    %c0_i32 = arith.constant 0 : i32
    %c0_i32_0 = arith.constant 0 : i32
    %c0_i32_1 = arith.constant 0 : i32
    return %c0_i32, %c0_i32_0 : i32, i32
  }
  func.func @transform_4(%arg0: i32) -> (i32, i32) {
    %c0_i32 = arith.constant 0 : i32
    %c0_i32_0 = arith.constant 0 : i32
    %c0_i32_1 = arith.constant 0 : i32
    return %c0_i32, %c0_i32_0 : i32, i32
  }
  func.func @transform_5(%arg0: i32) -> (i32, i32) {
    %c0_i32 = arith.constant 0 : i32
    %c0_i32_0 = arith.constant 0 : i32
    return %arg0, %c0_i32 : i32, i32
  }
}

</mosaic_0001>

<llo_original>
// kernel: tpu_custom_call.1
$region0: #{tpu_custom_call.1}
  #allocation0 [shape = 'u32[]', space=smem, size = 0x4, offset = 0x4, fixed_abs, tag = 'smem constant byte address 0x4 - core index']
  #allocation1 [shape = 'u32[144,128]{1,0:T(1,128)}', space=vmem, size = 0x12000, scoped, tag = 'internal scratch']
  %s0 = inlined_call_operand.hbm [shape: f32[8,896], index: 0, kind: input, shape index: {}]
  %s1 = inlined_call_operand.hbm [shape: f32[896,128], index: 1, kind: input, shape index: {}]
  %s2 = inlined_call_operand.vmem [shape: f32[1,128], index: 2, kind: input, shape index: {}]
  %s3 = inlined_call_operand.hbm [shape: f32[128,128], index: 3, kind: input, shape index: {}]
  %s4 = inlined_call_operand.vmem [shape: f32[1,128], index: 4, kind: input, shape index: {}]
  %s5 = inlined_call_operand.hbm [shape: f32[8,128], index: 5, kind: output, shape index: {}]
  %s6 = sld [smem:[#allocation0]]
  $region42: #{tpu_custom_call.1} parent=0
    _
  %s8 = ssub.s32 1, %s6
  %s9 = scalar_select 0, %s8, %s6
  $region1: #{tpu_custom_call.1} parent=0
    #allocation2 [shape = 'u8[28672]{0}', space=vmem, size = 0x7000, scoped, tag = 'input window, operand 0, single buffered']
    #allocation3 [shape = 's32[1]{0}', space=sflag, size = 0x4, scoped, tag = 'scoped memory for tpu_custom_call.1']
    #allocation4 [shape = 's32[1]{0}', space=sflag, size = 0x4, scoped, tag = 'scoped memory for tpu_custom_call.1']
    #allocation5 [shape = 'u8[458752]{0}', space=vmem, size = 0x70000, scoped, tag = 'input window, operand 1, single buffered']
    #allocation6 [shape = 's32[1]{0}', space=sflag, size = 0x4, scoped, tag = 'scoped memory for tpu_custom_call.1']
    #allocation7 [shape = 'u8[65536]{0}', space=vmem, size = 0x10000, scoped, tag = 'input window, operand 3, single buffered']
    #allocation8 [shape = 'u8[4096]{0}', space=vmem, size = 0x1000, scoped, tag = 'output window, operand 0, single buffered']
    %10 = vsyncpa [#allocation3], 0
    %11 = vsyncpa [#allocation6], 0
    %12 = vsyncpa [#allocation4], 0
    // Predicated region
    $region2: #{tpu_custom_call.1} parent=1 // pred_check
      _
    $region3: #{tpu_custom_call.1} parent=1 // pred_check_branch
      %14 = sbr.rel (0) target = $region5
    $region4: #{tpu_custom_call.1} parent=1 // pred_region
      %s16 = ssub.s32 896, 896
      %17 = vsyncadd [#allocation3], %s16
      %s19 = sshll.u32 [#allocation2], 4
      %s20 = int_to_ptr.vmem [resolvable:$true] %s19
      %22 = dma.hbm_to_vmem [thread:$0]  %s0, 896, %s20, [#allocation3]
    $region5: #{tpu_custom_call.1} parent=1 // pred_fallthru
      _
    // Predicated region
    $region6: #{tpu_custom_call.1} parent=1 // pred_check
      _
    $region7: #{tpu_custom_call.1} parent=1 // pred_check_branch
      %24 = sbr.rel (0) target = $region9
    $region8: #{tpu_custom_call.1} parent=1 // pred_region
      %s26 = ssub.s32 14336, 14336
      %27 = vsyncadd [#allocation6], %s26
      %s28 = sshll.u32 [#allocation5], 4
      %s29 = int_to_ptr.vmem [resolvable:$true] %s28
      %34 = dma.hbm_to_vmem [thread:$0]  %s1, 14336, %s29, [#allocation6], 128, 128, 8
    $region9: #{tpu_custom_call.1} parent=1 // pred_fallthru
      _
    // Predicated region
    $region10: #{tpu_custom_call.1} parent=1 // pred_check
      _
    $region11: #{tpu_custom_call.1} parent=1 // pred_check_branch
      %36 = sbr.rel (0) target = $region13
    $region12: #{tpu_custom_call.1} parent=1 // pred_region
      _
    $region13: #{tpu_custom_call.1} parent=1 // pred_fallthru
      _
    // Predicated region
    $region14: #{tpu_custom_call.1} parent=1 // pred_check
      _
    $region15: #{tpu_custom_call.1} parent=1 // pred_check_branch
      %38 = sbr.rel (0) target = $region17
    $region16: #{tpu_custom_call.1} parent=1 // pred_region
      %s40 = ssub.s32 2048, 2048
      %41 = vsyncadd [#allocation6], %s40
      %s42 = sshll.u32 [#allocation7], 4
      %s43 = int_to_ptr.vmem [resolvable:$true] %s42
      %48 = dma.hbm_to_vmem [thread:$0]  %s3, 2048, %s43, [#allocation6], 128, 128, 8
    $region17: #{tpu_custom_call.1} parent=1 // pred_fallthru
      _
    // Predicated region
    $region18: #{tpu_custom_call.1} parent=1 // pred_check
      _
    $region19: #{tpu_custom_call.1} parent=1 // pred_check_branch
      %50 = sbr.rel (0) target = $region21
    $region20: #{tpu_custom_call.1} parent=1 // pred_region
      _
    $region21: #{tpu_custom_call.1} parent=1 // pred_fallthru
      _
    // Predicated region
    $region22: #{tpu_custom_call.1} parent=1 // pred_check
      _
    $region23: #{tpu_custom_call.1} parent=1 // pred_check_branch
      %52 = sbr.rel (0) target = $region25
    $region24: #{tpu_custom_call.1} parent=1 // pred_region
      %53 = dma.done [#allocation3], 896
    $region25: #{tpu_custom_call.1} parent=1 // pred_fallthru
      _
    // Predicated region
    $region26: #{tpu_custom_call.1} parent=1 // pred_check
      _
    $region27: #{tpu_custom_call.1} parent=1 // pred_check_branch
      %55 = sbr.rel (0) target = $region29
    $region28: #{tpu_custom_call.1} parent=1 // pred_region
      %56 = dma.done [#allocation6], 14336
    $region29: #{tpu_custom_call.1} parent=1 // pred_fallthru
      _
    // Predicated region
    $region30: #{tpu_custom_call.1} parent=1 // pred_check
      _
    $region31: #{tpu_custom_call.1} parent=1 // pred_check_branch
      %58 = sbr.rel (0) target = $region33
    $region32: #{tpu_custom_call.1} parent=1 // pred_region
      %59 = dma.done [#allocation6], 2048
    $region33: #{tpu_custom_call.1} parent=1 // pred_fallthru
      _
    %v60 = vld [vmem:[#allocation2] sm:$0xff]
    %v61 = vld [vmem:[#allocation2 + $0x8] sm:$0xff]
    %v62 = vld [vmem:[#allocation2 + $0x10] sm:$0xff]
    %v63 = vld [vmem:[#allocation2 + $0x18] sm:$0xff]
    %v64 = vld [vmem:[#allocation2 + $0x20] sm:$0xff]
    %v65 = vld [vmem:[#allocation2 + $0x28] sm:$0xff]
    %v66 = vld [vmem:[#allocation2 + $0x30] sm:$0xff]
    %v67 = vld [vmem:[#allocation5] sm:$0xff]
    %v68 = vld [vmem:[#allocation5 + $0x8] sm:$0xff]
    %v69 = vld [vmem:[#allocation5 + $0x10] sm:$0xff]
    %v70 = vld [vmem:[#allocation5 + $0x18] sm:$0xff]
    %v71 = vld [vmem:[#allocation5 + $0x20] sm:$0xff]
    %v72 = vld [vmem:[#allocation5 + $0x28] sm:$0xff]
    %v73 = vld [vmem:[#allocation5 + $0x30] sm:$0xff]
    %v74 = vld [vmem:[#allocation5 + $0x38] sm:$0xff]
    %v75 = vld [vmem:[#allocation5 + $0x40] sm:$0xff]
    %v76 = vld [vmem:[#allocation5 + $0x48] sm:$0xff]
    %v77 = vld [vmem:[#allocation5 + $0x50] sm:$0xff]
    %v78 = vld [vmem:[#allocation5 + $0x58] sm:$0xff]
    %v79 = vld [vmem:[#allocation5 + $0x60] sm:$0xff]
    %v80 = vld [vmem:[#allocation5 + $0x68] sm:$0xff]
    %v81 = vld [vmem:[#allocation5 + $0x70] sm:$0xff]
    %v82 = vld [vmem:[#allocation5 + $0x78] sm:$0xff]
    %v83 = vld [vmem:[#allocation5 + $0x80] sm:$0xff]
    %v84 = vld [vmem:[#allocation5 + $0x88] sm:$0xff]
    %v85 = vld [vmem:[#allocation5 + $0x90] sm:$0xff]
    %v86 = vld [vmem:[#allocation5 + $0x98] sm:$0xff]
    %v87 = vld [vmem:[#allocation5 + $0xa0] sm:$0xff]
    %v88 = vld [vmem:[#allocation5 + $0xa8] sm:$0xff]
    %v89 = vld [vmem:[#allocation5 + $0xb0] sm:$0xff]
    %v90 = vld [vmem:[#allocation5 + $0xb8] sm:$0xff]
    %v91 = vld [vmem:[#allocation5 + $0xc0] sm:$0xff]
    %v92 = vld [vmem:[#allocation5 + $0xc8] sm:$0xff]
    %v93 = vld [vmem:[#allocation5 + $0xd0] sm:$0xff]
    %v94 = vld [vmem:[#allocation5 + $0xd8] sm:$0xff]
    %v95 = vld [vmem:[#allocation5 + $0xe0] sm:$0xff]
    %v96 = vld [vmem:[#allocation5 + $0xe8] sm:$0xff]
    %v97 = vld [vmem:[#allocation5 + $0xf0] sm:$0xff]
    %v98 = vld [vmem:[#allocation5 + $0xf8] sm:$0xff]
    %v99 = vld [vmem:[#allocation5 + $0x100] sm:$0xff]
    %v100 = vld [vmem:[#allocation5 + $0x108] sm:$0xff]
    %v101 = vld [vmem:[#allocation5 + $0x110] sm:$0xff]
    %v102 = vld [vmem:[#allocation5 + $0x118] sm:$0xff]
    %v103 = vld [vmem:[#allocation5 + $0x120] sm:$0xff]
    %v104 = vld [vmem:[#allocation5 + $0x128] sm:$0xff]
    %v105 = vld [vmem:[#allocation5 + $0x130] sm:$0xff]
    %v106 = vld [vmem:[#allocation5 + $0x138] sm:$0xff]
    %v107 = vld [vmem:[#allocation5 + $0x140] sm:$0xff]
    %v108 = vld [vmem:[#allocation5 + $0x148] sm:$0xff]
    %v109 = vld [vmem:[#allocation5 + $0x150] sm:$0xff]
    %v110 = vld [vmem:[#allocation5 + $0x158] sm:$0xff]
    %v111 = vld [vmem:[#allocation5 + $0x160] sm:$0xff]
    %v112 = vld [vmem:[#allocation5 + $0x168] sm:$0xff]
    %v113 = vld [vmem:[#allocation5 + $0x170] sm:$0xff]
    %v114 = vld [vmem:[#allocation5 + $0x178] sm:$0xff]
    %v115 = vld [vmem:[#allocation5 + $0x180] sm:$0xff]
    %v116 = vld [vmem:[#allocation5 + $0x188] sm:$0xff]
    %v117 = vld [vmem:[#allocation5 + $0x190] sm:$0xff]
    %v118 = vld [vmem:[#allocation5 + $0x198] sm:$0xff]
    %v119 = vld [vmem:[#allocation5 + $0x1a0] sm:$0xff]
    %v120 = vld [vmem:[#allocation5 + $0x1a8] sm:$0xff]
    %v121 = vld [vmem:[#allocation5 + $0x1b0] sm:$0xff]
    %v122 = vld [vmem:[#allocation5 + $0x1b8] sm:$0xff]
    %v123 = vld [vmem:[#allocation5 + $0x1c0] sm:$0xff]
    %v124 = vld [vmem:[#allocation5 + $0x1c8] sm:$0xff]
    %v125 = vld [vmem:[#allocation5 + $0x1d0] sm:$0xff]
    %v126 = vld [vmem:[#allocation5 + $0x1d8] sm:$0xff]
    %v127 = vld [vmem:[#allocation5 + $0x1e0] sm:$0xff]
    %v128 = vld [vmem:[#allocation5 + $0x1e8] sm:$0xff]
    %v129 = vld [vmem:[#allocation5 + $0x1f0] sm:$0xff]
    %v130 = vld [vmem:[#allocation5 + $0x1f8] sm:$0xff]
    %v131 = vld [vmem:[#allocation5 + $0x200] sm:$0xff]
    %v132 = vld [vmem:[#allocation5 + $0x208] sm:$0xff]
    %v133 = vld [vmem:[#allocation5 + $0x210] sm:$0xff]
    %v134 = vld [vmem:[#allocation5 + $0x218] sm:$0xff]
    %v135 = vld [vmem:[#allocation5 + $0x220] sm:$0xff]
    %v136 = vld [vmem:[#allocation5 + $0x228] sm:$0xff]
    %v137 = vld [vmem:[#allocation5 + $0x230] sm:$0xff]
    %v138 = vld [vmem:[#allocation5 + $0x238] sm:$0xff]
    %v139 = vld [vmem:[#allocation5 + $0x240] sm:$0xff]
    %v140 = vld [vmem:[#allocation5 + $0x248] sm:$0xff]
    %v141 = vld [vmem:[#allocation5 + $0x250] sm:$0xff]
    %v142 = vld [vmem:[#allocation5 + $0x258] sm:$0xff]
    %v143 = vld [vmem:[#allocation5 + $0x260] sm:$0xff]
    %v144 = vld [vmem:[#allocation5 + $0x268] sm:$0xff]
    %v145 = vld [vmem:[#allocation5 + $0x270] sm:$0xff]
    %v146 = vld [vmem:[#allocation5 + $0x278] sm:$0xff]
    %v147 = vld [vmem:[#allocation5 + $0x280] sm:$0xff]
    %v148 = vld [vmem:[#allocation5 + $0x288] sm:$0xff]
    %v149 = vld [vmem:[#allocation5 + $0x290] sm:$0xff]
    %v150 = vld [vmem:[#allocation5 + $0x298] sm:$0xff]
    %v151 = vld [vmem:[#allocation5 + $0x2a0] sm:$0xff]
    %v152 = vld [vmem:[#allocation5 + $0x2a8] sm:$0xff]
    %v153 = vld [vmem:[#allocation5 + $0x2b0] sm:$0xff]
    %v154 = vld [vmem:[#allocation5 + $0x2b8] sm:$0xff]
    %v155 = vld [vmem:[#allocation5 + $0x2c0] sm:$0xff]
    %v156 = vld [vmem:[#allocation5 + $0x2c8] sm:$0xff]
    %v157 = vld [vmem:[#allocation5 + $0x2d0] sm:$0xff]
    %v158 = vld [vmem:[#allocation5 + $0x2d8] sm:$0xff]
    %v159 = vld [vmem:[#allocation5 + $0x2e0] sm:$0xff]
    %v160 = vld [vmem:[#allocation5 + $0x2e8] sm:$0xff]
    %v161 = vld [vmem:[#allocation5 + $0x2f0] sm:$0xff]
    %v162 = vld [vmem:[#allocation5 + $0x2f8] sm:$0xff]
    %v163 = vld [vmem:[#allocation5 + $0x300] sm:$0xff]
    %v164 = vld [vmem:[#allocation5 + $0x308] sm:$0xff]
    %v165 = vld [vmem:[#allocation5 + $0x310] sm:$0xff]
    %v166 = vld [vmem:[#allocation5 + $0x318] sm:$0xff]
    %v167 = vld [vmem:[#allocation5 + $0x320] sm:$0xff]
    %v168 = vld [vmem:[#allocation5 + $0x328] sm:$0xff]
    %v169 = vld [vmem:[#allocation5 + $0x330] sm:$0xff]
    %v170 = vld [vmem:[#allocation5 + $0x338] sm:$0xff]
    %v171 = vld [vmem:[#allocation5 + $0x340] sm:$0xff]
    %v172 = vld [vmem:[#allocation5 + $0x348] sm:$0xff]
    %v173 = vld [vmem:[#allocation5 + $0x350] sm:$0xff]
    %v174 = vld [vmem:[#allocation5 + $0x358] sm:$0xff]
    %v175 = vld [vmem:[#allocation5 + $0x360] sm:$0xff]
    %v176 = vld [vmem:[#allocation5 + $0x368] sm:$0xff]
    %v177 = vld [vmem:[#allocation5 + $0x370] sm:$0xff]
    %v178 = vld [vmem:[#allocation5 + $0x378] sm:$0xff]
    %v179 = vld [vmem:[%s2] sm:$0x1]
    %v181 = vlaneseq
    %v182 = vshrl.u32 %v181, 7
    %v183 = vsub.s32 0, %v182
    %v184 = vrot.slane %v179, %v183
    %186 = vmatprep.subr.mxu0 0.0
    %187 = vmatpush1.msra.mxu0 %v82
    %188 = vmatprep.subr.mxu0 0.0
    %189 = vmatpush1.msra.mxu0 %v81
    %190 = vmatprep.subr.mxu0 0.0
    %191 = vmatpush1.msra.mxu0 %v80
    %192 = vmatprep.subr.mxu0 0.0
    %193 = vmatpush1.msra.mxu0 %v79
    %194 = vmatprep.subr.mxu0 0.0
    %195 = vmatpush1.msra.mxu0 %v78
    %196 = vmatprep.subr.mxu0 0.0
    %197 = vmatpush1.msra.mxu0 %v77
    %198 = vmatprep.subr.mxu0 0.0
    %199 = vmatpush1.msra.mxu0 %v76
    %200 = vmatprep.subr.mxu0 0.0
    %201 = vmatpush1.msra.mxu0 %v75
    %202 = vmatprep.subr.mxu0 0.0
    %203 = vmatpush1.msra.mxu0 %v74
    %204 = vmatprep.subr.mxu0 0.0
    %205 = vmatpush1.msra.mxu0 %v73
    %206 = vmatprep.subr.mxu0 0.0
    %207 = vmatpush1.msra.mxu0 %v72
    %208 = vmatprep.subr.mxu0 0.0
    %209 = vmatpush1.msra.mxu0 %v71
    %210 = vmatprep.subr.mxu0 0.0
    %211 = vmatpush1.msra.mxu0 %v70
    %212 = vmatprep.subr.mxu0 0.0
    %213 = vmatpush1.msra.mxu0 %v69
    %214 = vmatprep.subr.mxu0 0.0
    %215 = vmatpush1.msra.mxu0 %v68
    %216 = vmatprep.subr.mxu0 0.0
    %217 = vmatpush1.msra.mxu0 %v67
    %218 = vmatprep.subr.mxu0 0.0
    %219 = vmatpush2.msra.mxu0 %v98
    %220 = vmatprep.subr.mxu0 0.0
    %221 = vmatpush2.msra.mxu0 %v97
    %222 = vmatprep.subr.mxu0 0.0
    %223 = vmatpush2.msra.mxu0 %v96
    %224 = vmatprep.subr.mxu0 0.0
    %225 = vmatpush2.msra.mxu0 %v95
    %226 = vmatprep.subr.mxu0 0.0
    %227 = vmatpush2.msra.mxu0 %v94
    %228 = vmatprep.subr.mxu0 0.0
    %229 = vmatpush2.msra.mxu0 %v93
    %230 = vmatprep.subr.mxu0 0.0
    %231 = vmatpush2.msra.mxu0 %v92
    %232 = vmatprep.subr.mxu0 0.0
    %233 = vmatpush2.msra.mxu0 %v91
    %234 = vmatprep.subr.mxu0 0.0
    %235 = vmatpush2.msra.mxu0 %v90
    %236 = vmatprep.subr.mxu0 0.0
    %237 = vmatpush2.msra.mxu0 %v89
    %238 = vmatprep.subr.mxu0 0.0
    %239 = vmatpush2.msra.mxu0 %v88
    %240 = vmatprep.subr.mxu0 0.0
    %241 = vmatpush2.msra.mxu0 %v87
    %242 = vmatprep.subr.mxu0 0.0
    %243 = vmatpush2.msra.mxu0 %v86
    %244 = vmatprep.subr.mxu0 0.0
    %245 = vmatpush2.msra.mxu0 %v85
    %246 = vmatprep.subr.mxu0 0.0
    %247 = vmatpush2.msra.mxu0 %v84
    %248 = vmatprep.subr.mxu0 0.0
    %249 = vmatpush2.msra.mxu0 %v83
    %250 = vmatprep.mubr.f32.mxu0 %v61
    %251 = vmatmul.mubr.f32.gmra.mxu0 %v60
    %v252 = vpop.f32.mrf.mxu0
    %v253 = vadd.f32 %v184, %v252
    %v254 = vpop.f32.mrf.mxu0
    %255 = vdwg.mxu0
    %256 = vmatprep.subr.mxu0 0.0
    %257 = vmatpush1.msra.mxu0 %v114
    %258 = vmatprep.subr.mxu0 0.0
    %259 = vmatpush1.msra.mxu0 %v113
    %260 = vmatprep.subr.mxu0 0.0
    %261 = vmatpush1.msra.mxu0 %v112
    %262 = vmatprep.subr.mxu0 0.0
    %263 = vmatpush1.msra.mxu0 %v111
    %264 = vmatprep.subr.mxu0 0.0
    %265 = vmatpush1.msra.mxu0 %v110
    %266 = vmatprep.subr.mxu0 0.0
    %267 = vmatpush1.msra.mxu0 %v109
    %268 = vmatprep.subr.mxu0 0.0
    %269 = vmatpush1.msra.mxu0 %v108
    %270 = vmatprep.subr.mxu0 0.0
    %271 = vmatpush1.msra.mxu0 %v107
    %272 = vmatprep.subr.mxu0 0.0
    %273 = vmatpush1.msra.mxu0 %v106
    %274 = vmatprep.subr.mxu0 0.0
    %275 = vmatpush1.msra.mxu0 %v105
    %276 = vmatprep.subr.mxu0 0.0
    %277 = vmatpush1.msra.mxu0 %v104
    %278 = vmatprep.subr.mxu0 0.0
    %279 = vmatpush1.msra.mxu0 %v103
    %280 = vmatprep.subr.mxu0 0.0
    %281 = vmatpush1.msra.mxu0 %v102
    %282 = vmatprep.subr.mxu0 0.0
    %283 = vmatpush1.msra.mxu0 %v101
    %284 = vmatprep.subr.mxu0 0.0
    %285 = vmatpush1.msra.mxu0 %v100
    %286 = vmatprep.subr.mxu0 0.0
    %287 = vmatpush1.msra.mxu0 %v99
    %288 = vmatprep.subr.mxu0 0.0
    %289 = vmatpush2.msra.mxu0 %v130
    %290 = vmatprep.subr.mxu0 0.0
    %291 = vmatpush2.msra.mxu0 %v129
    %292 = vmatprep.subr.mxu0 0.0
    %293 = vmatpush2.msra.mxu0 %v128
    %294 = vmatprep.subr.mxu0 0.0
    %295 = vmatpush2.msra.mxu0 %v127
    %296 = vmatprep.subr.mxu0 0.0
    %297 = vmatpush2.msra.mxu0 %v126
    %298 = vmatprep.subr.mxu0 0.0
    %299 = vmatpush2.msra.mxu0 %v125
    %300 = vmatprep.subr.mxu0 0.0
    %301 = vmatpush2.msra.mxu0 %v124
    %302 = vmatprep.subr.mxu0 0.0
    %303 = vmatpush2.msra.mxu0 %v123
    %304 = vmatprep.subr.mxu0 0.0
    %305 = vmatpush2.msra.mxu0 %v122
    %306 = vmatprep.subr.mxu0 0.0
    %307 = vmatpush2.msra.mxu0 %v121
    %308 = vmatprep.subr.mxu0 0.0
    %309 = vmatpush2.msra.mxu0 %v120
    %310 = vmatprep.subr.mxu0 0.0
    %311 = vmatpush2.msra.mxu0 %v119
    %312 = vmatprep.subr.mxu0 0.0
    %313 = vmatpush2.msra.mxu0 %v118
    %314 = vmatprep.subr.mxu0 0.0
    %315 = vmatpush2.msra.mxu0 %v117
    %316 = vmatprep.subr.mxu0 0.0
    %317 = vmatpush2.msra.mxu0 %v116
    %318 = vmatprep.subr.mxu0 0.0
    %319 = vmatpush2.msra.mxu0 %v115
    %320 = vmatprep.mubr.f32.mxu0 %v63
    %321 = vmatmul.mubr.f32.gmra.mxu0 %v62
    %v322 = vpop.f32.mrf.mxu0
    %v323 = vadd.f32 %v253, %v322
    %v324 = vpop.f32.mrf.mxu0
    %325 = vdwg.mxu0
    %326 = vmatprep.subr.mxu0 0.0
    %327 = vmatpush1.msra.mxu0 %v146
    %328 = vmatprep.subr.mxu0 0.0
    %329 = vmatpush1.msra.mxu0 %v145
    %330 = vmatprep.subr.mxu0 0.0
    %331 = vmatpush1.msra.mxu0 %v144
    %332 = vmatprep.subr.mxu0 0.0
    %333 = vmatpush1.msra.mxu0 %v143
    %334 = vmatprep.subr.mxu0 0.0
    %335 = vmatpush1.msra.mxu0 %v142
    %336 = vmatprep.subr.mxu0 0.0
    %337 = vmatpush1.msra.mxu0 %v141
    %338 = vmatprep.subr.mxu0 0.0
    %339 = vmatpush1.msra.mxu0 %v140
    %340 = vmatprep.subr.mxu0 0.0
    %341 = vmatpush1.msra.mxu0 %v139
    %342 = vmatprep.subr.mxu0 0.0
    %343 = vmatpush1.msra.mxu0 %v138
    %344 = vmatprep.subr.mxu0 0.0
    %345 = vmatpush1.msra.mxu0 %v137
    %346 = vmatprep.subr.mxu0 0.0
    %347 = vmatpush1.msra.mxu0 %v136
    %348 = vmatprep.subr.mxu0 0.0
    %349 = vmatpush1.msra.mxu0 %v135
    %350 = vmatprep.subr.mxu0 0.0
    %351 = vmatpush1.msra.mxu0 %v134
    %352 = vmatprep.subr.mxu0 0.0
    %353 = vmatpush1.msra.mxu0 %v133
    %354 = vmatprep.subr.mxu0 0.0
    %355 = vmatpush1.msra.mxu0 %v132
    %356 = vmatprep.subr.mxu0 0.0
    %357 = vmatpush1.msra.mxu0 %v131
    %358 = vmatprep.subr.mxu0 0.0
    %359 = vmatpush2.msra.mxu0 %v162
    %360 = vmatprep.subr.mxu0 0.0
    %361 = vmatpush2.msra.mxu0 %v161
    %362 = vmatprep.subr.mxu0 0.0
    %363 = vmatpush2.msra.mxu0 %v160
    %364 = vmatprep.subr.mxu0 0.0
    %365 = vmatpush2.msra.mxu0 %v159
    %366 = vmatprep.subr.mxu0 0.0
    %367 = vmatpush2.msra.mxu0 %v158
    %368 = vmatprep.subr.mxu0 0.0
    %369 = vmatpush2.msra.mxu0 %v157
    %370 = vmatprep.subr.mxu0 0.0
    %371 = vmatpush2.msra.mxu0 %v156
    %372 = vmatprep.subr.mxu0 0.0
    %373 = vmatpush2.msra.mxu0 %v155
    %374 = vmatprep.subr.mxu0 0.0
    %375 = vmatpush2.msra.mxu0 %v154
    %376 = vmatprep.subr.mxu0 0.0
    %377 = vmatpush2.msra.mxu0 %v153
    %378 = vmatprep.subr.mxu0 0.0
    %379 = vmatpush2.msra.mxu0 %v152
    %380 = vmatprep.subr.mxu0 0.0
    %381 = vmatpush2.msra.mxu0 %v151
    %382 = vmatprep.subr.mxu0 0.0
    %383 = vmatpush2.msra.mxu0 %v150
    %384 = vmatprep.subr.mxu0 0.0
    %385 = vmatpush2.msra.mxu0 %v149
    %386 = vmatprep.subr.mxu0 0.0
    %387 = vmatpush2.msra.mxu0 %v148
    %388 = vmatprep.subr.mxu0 0.0
    %389 = vmatpush2.msra.mxu0 %v147
    %390 = vmatprep.mubr.f32.mxu0 %v65
    %391 = vmatmul.mubr.f32.gmra.mxu0 %v64
    %v392 = vpop.f32.mrf.mxu0
    %v393 = vadd.f32 %v323, %v392
    %v394 = vpop.f32.mrf.mxu0
    %395 = vdwg.mxu0
    %396 = vmatprep.subr.mxu0 0.0
    %397 = vmatpush1.msra.mxu0 %v178
    %398 = vmatprep.subr.mxu0 0.0
    %399 = vmatpush1.msra.mxu0 %v177
    %400 = vmatprep.subr.mxu0 0.0
    %401 = vmatpush1.msra.mxu0 %v176
    %402 = vmatprep.subr.mxu0 0.0
    %403 = vmatpush1.msra.mxu0 %v175
    %404 = vmatprep.subr.mxu0 0.0
    %405 = vmatpush1.msra.mxu0 %v174
    %406 = vmatprep.subr.mxu0 0.0
    %407 = vmatpush1.msra.mxu0 %v173
    %408 = vmatprep.subr.mxu0 0.0
    %409 = vmatpush1.msra.mxu0 %v172
    %410 = vmatprep.subr.mxu0 0.0
    %411 = vmatpush1.msra.mxu0 %v171
    %412 = vmatprep.subr.mxu0 0.0
    %413 = vmatpush1.msra.mxu0 %v170
    %414 = vmatprep.subr.mxu0 0.0
    %415 = vmatpush1.msra.mxu0 %v169
    %416 = vmatprep.subr.mxu0 0.0
    %417 = vmatpush1.msra.mxu0 %v168
    %418 = vmatprep.subr.mxu0 0.0
    %419 = vmatpush1.msra.mxu0 %v167
    %420 = vmatprep.subr.mxu0 0.0
    %421 = vmatpush1.msra.mxu0 %v166
    %422 = vmatprep.subr.mxu0 0.0
    %423 = vmatpush1.msra.mxu0 %v165
    %424 = vmatprep.subr.mxu0 0.0
    %425 = vmatpush1.msra.mxu0 %v164
    %426 = vmatprep.subr.mxu0 0.0
    %427 = vmatpush1.msra.mxu0 %v163
    %428 = vmatprep.subr.mxu0 0.0
    %429 = vmatpush2.msra.mxu0 0.0
    %430 = vmatprep.subr.mxu0 0.0
    %431 = vmatpush2.msra.mxu0 0.0
    %432 = vmatprep.subr.mxu0 0.0
    %433 = vmatpush2.msra.mxu0 0.0
    %434 = vmatprep.subr.mxu0 0.0
    %435 = vmatpush2.msra.mxu0 0.0
    %436 = vmatprep.subr.mxu0 0.0
    %437 = vmatpush2.msra.mxu0 0.0
    %438 = vmatprep.subr.mxu0 0.0
    %439 = vmatpush2.msra.mxu0 0.0
    %440 = vmatprep.subr.mxu0 0.0
    %441 = vmatpush2.msra.mxu0 0.0
    %442 = vmatprep.subr.mxu0 0.0
    %443 = vmatpush2.msra.mxu0 0.0
    %444 = vmatprep.subr.mxu0 0.0
    %445 = vmatpush2.msra.mxu0 0.0
    %446 = vmatprep.subr.mxu0 0.0
    %447 = vmatpush2.msra.mxu0 0.0
    %448 = vmatprep.subr.mxu0 0.0
    %449 = vmatpush2.msra.mxu0 0.0
    %450 = vmatprep.subr.mxu0 0.0
    %451 = vmatpush2.msra.mxu0 0.0
    %452 = vmatprep.subr.mxu0 0.0
    %453 = vmatpush2.msra.mxu0 0.0
    %454 = vmatprep.subr.mxu0 0.0
    %455 = vmatpush2.msra.mxu0 0.0
    %456 = vmatprep.subr.mxu0 0.0
    %457 = vmatpush2.msra.mxu0 0.0
    %458 = vmatprep.subr.mxu0 0.0
    %459 = vmatpush2.msra.mxu0 0.0
    %460 = vmatprep.mubr.f32.mxu0 0.0
    %461 = vmatmul.mubr.f32.gmra.mxu0 %v66
    %v462 = vpop.f32.mrf.mxu0
    %v463 = vadd.f32 %v393, %v462
    %v464 = vpop.f32.mrf.mxu0
    %465 = vdwg.mxu0
    %v466 = vmax.f32 %v463, 0.0
    %v467 = vld [vmem:[#allocation7] sm:$0xff]
    %v468 = vld [vmem:[#allocation7 + $0x8] sm:$0xff]
    %v469 = vld [vmem:[#allocation7 + $0x10] sm:$0xff]
    %v470 = vld [vmem:[#allocation7 + $0x18] sm:$0xff]
    %v471 = vld [vmem:[#allocation7 + $0x20] sm:$0xff]
    %v472 = vld [vmem:[#allocation7 + $0x28] sm:$0xff]
    %v473 = vld [vmem:[#allocation7 + $0x30] sm:$0xff]
    %v474 = vld [vmem:[#allocation7 + $0x38] sm:$0xff]
    %v475 = vld [vmem:[#allocation7 + $0x40] sm:$0xff]
    %v476 = vld [vmem:[#allocation7 + $0x48] sm:$0xff]
    %v477 = vld [vmem:[#allocation7 + $0x50] sm:$0xff]
    %v478 = vld [vmem:[#allocation7 + $0x58] sm:$0xff]
    %v479 = vld [vmem:[#allocation7 + $0x60] sm:$0xff]
    %v480 = vld [vmem:[#allocation7 + $0x68] sm:$0xff]
    %v481 = vld [vmem:[#allocation7 + $0x70] sm:$0xff]
    %v482 = vld [vmem:[#allocation7 + $0x78] sm:$0xff]
    %v483 = vld [vmem:[%s4] sm:$0x1]
    %v485 = vlaneseq
    %v486 = vshrl.u32 %v485, 7
    %v487 = vsub.s32 0, %v486
    %v488 = vrot.slane %v483, %v487
    %490 = vmatprep.subr.mxu0 0.0
    %491 = vmatpush1.msra.mxu0 %v482
    %492 = vmatprep.subr.mxu0 0.0
    %493 = vmatpush1.msra.mxu0 %v481
    %494 = vmatprep.subr.mxu0 0.0
    %495 = vmatpush1.msra.mxu0 %v480
    %496 = vmatprep.subr.mxu0 0.0
    %497 = vmatpush1.msra.mxu0 %v479
    %498 = vmatprep.subr.mxu0 0.0
    %499 = vmatpush1.msra.mxu0 %v478
    %500 = vmatprep.subr.mxu0 0.0
    %501 = vmatpush1.msra.mxu0 %v477
    %502 = vmatprep.subr.mxu0 0.0
    %503 = vmatpush1.msra.mxu0 %v476
    %504 = vmatprep.subr.mxu0 0.0
    %505 = vmatpush1.msra.mxu0 %v475
    %506 = vmatprep.subr.mxu0 0.0
    %507 = vmatpush1.msra.mxu0 %v474
    %508 = vmatprep.subr.mxu0 0.0
    %509 = vmatpush1.msra.mxu0 %v473
    %510 = vmatprep.subr.mxu0 0.0
    %511 = vmatpush1.msra.mxu0 %v472
    %512 = vmatprep.subr.mxu0 0.0
    %513 = vmatpush1.msra.mxu0 %v471
    %514 = vmatprep.subr.mxu0 0.0
    %515 = vmatpush1.msra.mxu0 %v470
    %516 = vmatprep.subr.mxu0 0.0
    %517 = vmatpush1.msra.mxu0 %v469
    %518 = vmatprep.subr.mxu0 0.0
    %519 = vmatpush1.msra.mxu0 %v468
    %520 = vmatprep.subr.mxu0 0.0
    %521 = vmatpush1.msra.mxu0 %v467
    %522 = vmatprep.subr.mxu0 0.0
    %523 = vmatpush2.msra.mxu0 0.0
    %524 = vmatprep.subr.mxu0 0.0
    %525 = vmatpush2.msra.mxu0 0.0
    %526 = vmatprep.subr.mxu0 0.0
    %527 = vmatpush2.msra.mxu0 0.0
    %528 = vmatprep.subr.mxu0 0.0
    %529 = vmatpush2.msra.mxu0 0.0
    %530 = vmatprep.subr.mxu0 0.0
    %531 = vmatpush2.msra.mxu0 0.0
    %532 = vmatprep.subr.mxu0 0.0
    %533 = vmatpush2.msra.mxu0 0.0
    %534 = vmatprep.subr.mxu0 0.0
    %535 = vmatpush2.msra.mxu0 0.0
    %536 = vmatprep.subr.mxu0 0.0
    %537 = vmatpush2.msra.mxu0 0.0
    %538 = vmatprep.subr.mxu0 0.0
    %539 = vmatpush2.msra.mxu0 0.0
    %540 = vmatprep.subr.mxu0 0.0
    %541 = vmatpush2.msra.mxu0 0.0
    %542 = vmatprep.subr.mxu0 0.0
    %543 = vmatpush2.msra.mxu0 0.0
    %544 = vmatprep.subr.mxu0 0.0
    %545 = vmatpush2.msra.mxu0 0.0
    %546 = vmatprep.subr.mxu0 0.0
    %547 = vmatpush2.msra.mxu0 0.0
    %548 = vmatprep.subr.mxu0 0.0
    %549 = vmatpush2.msra.mxu0 0.0
    %550 = vmatprep.subr.mxu0 0.0
    %551 = vmatpush2.msra.mxu0 0.0
    %552 = vmatprep.subr.mxu0 0.0
    %553 = vmatpush2.msra.mxu0 0.0
    %554 = vmatprep.mubr.f32.mxu0 0.0
    %555 = vmatmul.mubr.f32.gmra.mxu0 %v466
    %v556 = vpop.f32.mrf.mxu0
    %v557 = vadd.f32 %v488, %v556
    %v558 = vpop.f32.mrf.mxu0
    %559 = vdwg.mxu0
    %560 = vst [vmem:[#allocation8] sm:$0xff] %v557
    // Predicated region
    $region34: #{tpu_custom_call.1} parent=1 // pred_check
      _
    $region35: #{tpu_custom_call.1} parent=1 // pred_check_branch
      %562 = sbr.rel (0) target = $region37
    $region36: #{tpu_custom_call.1} parent=1 // pred_region
      %s564 = ssub.s32 128, 128
      %565 = vsyncadd [#allocation4], %s564
      %s567 = sshll.u32 [#allocation8], 4
      %s568 = int_to_ptr.vmem [resolvable:$true] %s567
      %570 = dma.vmem_to_hbm [thread:$0]  %s568, 128, %s5, [#allocation4]
    $region37: #{tpu_custom_call.1} parent=1 // pred_fallthru
      _
    // Predicated region
    $region38: #{tpu_custom_call.1} parent=1 // pred_check
      _
    $region39: #{tpu_custom_call.1} parent=1 // pred_check_branch
      %572 = sbr.rel (0) target = $region41
    $region40: #{tpu_custom_call.1} parent=1 // pred_region
      %573 = dma.done [#allocation4], 128
    $region41: #{tpu_custom_call.1} parent=1 // pred_fallthru
      _
    %574 = vsyncpa [#allocation3], 1
    %575 = vsyncpa [#allocation6], 1
    %576 = vsyncpa [#allocation4], 1

</llo_original>
